<compile_context>
chip_gen: v7x
topology: tpu7x:2x2x1
jax: 0.10.0
libtpu: 0.0.40
codegen_flags: <defaults>
</compile_context>

<pallas_src>
import functools
import math

import jax
import jax.numpy as jnp
from jax.experimental import pallas as pl
from jax.experimental.pallas import tpu as pltpu

_BN_EPS = 1e-5


# ----------------------------------------------------------------------------
# Fused GEMM + BatchNorm(scale/shift) + optional residual + activation kernel
# ----------------------------------------------------------------------------
def _gemm_bn_act_kernel(*refs, act, has_res):
    if has_res:
        x_ref, w_ref, scale_ref, shift_ref, res_ref, o_ref = refs
    else:
        x_ref, w_ref, scale_ref, shift_ref, o_ref = refs
        res_ref = None

    acc = jnp.dot(x_ref[...], w_ref[...], preferred_element_type=jnp.float32)
    y = acc * scale_ref[...] + shift_ref[...]
    if has_res:
        y = y + res_ref[...].astype(jnp.float32)
    if act == "relu":
        y = jnp.maximum(y, 0.0)
    elif act == "sigmoid":
        y = 1.0 / (1.0 + jnp.exp(-y))
    o_ref[...] = y.astype(o_ref.dtype)


def _round_up(a, b):
    return (a + b - 1) // b * b


def gemm_bn_act(x, w, scale, shift, residual=None, act="none", out_dtype=None):
    """out = act((x @ w) * scale + shift [+ residual]), f32 accumulation."""
    M, K = x.shape
    K2, N = w.shape
    assert K == K2
    out_dtype = out_dtype or x.dtype

    # Pad K to a sublane multiple (zeros contribute nothing to the dot).
    Kp = _round_up(K, 8)
    if Kp != K:
        x = jnp.pad(x, ((0, 0), (0, Kp - K)))
        w = jnp.pad(w, ((0, Kp - K), (0, 0)))
        K = Kp

    TM = 128 if M > 128 else M
    TN = 128 if N > 128 else N
    Mp = _round_up(M, TM)
    Np = _round_up(N, TN)

    if Mp != M:
        x = jnp.pad(x, ((0, Mp - M), (0, 0)))
    if Np != N:
        w = jnp.pad(w, ((0, 0), (0, Np - N)))
        scale = jnp.pad(scale, (0, Np - N))
        shift = jnp.pad(shift, (0, Np - N))
    if residual is not None and (Mp != M or Np != N):
        residual = jnp.pad(residual, ((0, Mp - M), (0, Np - N)))

    scale2 = scale.reshape(1, Np).astype(jnp.float32)
    shift2 = shift.reshape(1, Np).astype(jnp.float32)

    in_specs = [
        pl.BlockSpec((TM, K), lambda i, j: (i, 0)),
        pl.BlockSpec((K, TN), lambda i, j: (0, j)),
        pl.BlockSpec((1, TN), lambda i, j: (0, j)),
        pl.BlockSpec((1, TN), lambda i, j: (0, j)),
    ]
    inputs = [x, w, scale2, shift2]
    if residual is not None:
        in_specs.append(pl.BlockSpec((TM, TN), lambda i, j: (i, j)))
        inputs.append(residual)

    out = pl.pallas_call(
        functools.partial(_gemm_bn_act_kernel, act=act,
                          has_res=residual is not None),
        out_shape=jax.ShapeDtypeStruct((Mp, Np), out_dtype),
        grid_spec=pltpu.PrefetchScalarGridSpec(
            num_scalar_prefetch=0,
            grid=(Mp // TM, Np // TN),
            in_specs=in_specs,
            out_specs=pl.BlockSpec((TM, TN), lambda i, j: (i, j)),
        ),
        compiler_params=pltpu.CompilerParams(
            dimension_semantics=("parallel", "parallel")),
        cost_estimate=pl.CostEstimate(
            flops=2 * Mp * Np * K,
            transcendentals=Mp * Np if act == "sigmoid" else 0,
            bytes_accessed=4 * (Mp * K + K * Np + Mp * Np)),
    )(*inputs)

    if Mp != M or Np != N:
        out = out[:M, :N]
    return out


# ----------------------------------------------------------------------------
# Convolution = im2col (layout only, in the wrapper) + fused Pallas GEMM
# ----------------------------------------------------------------------------
def _im2col(x, kh, kw, stride, padding):
    N, H, W, C = x.shape
    Ho = (H + 2 * padding - kh) // stride + 1
    Wo = (W + 2 * padding - kw) // stride + 1
    if padding:
        x = jnp.pad(x, ((0, 0), (padding, padding), (padding, padding), (0, 0)))
    cols = [x[:, i:i + stride * Ho:stride, j:j + stride * Wo:stride, :]
            for i in range(kh) for j in range(kw)]
    patches = jnp.concatenate(cols, axis=-1) if len(cols) > 1 else cols[0]
    return patches.reshape(N * Ho * Wo, kh * kw * C), Ho, Wo


def conv2d_bn_act(x, w, scale, shift, stride=1, padding=0, act="none",
                  residual=None):
    """x: (N,H,W,Cin) NHWC; w: (KH,KW,Cin,Cout). BN pre-folded to scale/shift."""
    N = x.shape[0]
    KH, KW, Cin, Cout = w.shape
    patches, Ho, Wo = _im2col(x, KH, KW, stride, padding)
    w2 = w.reshape(KH * KW * Cin, Cout)
    res2 = residual.reshape(N * Ho * Wo, Cout) if residual is not None else None
    out = gemm_bn_act(patches, w2, scale, shift, residual=res2, act=act)
    return out.reshape(N, Ho, Wo, Cout)


# ----------------------------------------------------------------------------
# x = x + noise_tensor * sigma  (elementwise kernel, lane-dense: C last)
# ----------------------------------------------------------------------------
def _scaled_add_kernel(x_ref, n_ref, o_ref, *, sigma):
    o_ref[...] = x_ref[...] + n_ref[...] * sigma


def add_scaled_noise(x, noise_t, sigma):
    N, H, W, C = x.shape
    M = N * H * W
    out = pl.pallas_call(
        functools.partial(_scaled_add_kernel, sigma=float(sigma)),
        out_shape=jax.ShapeDtypeStruct((M, C), x.dtype),
        grid_spec=pltpu.PrefetchScalarGridSpec(
            num_scalar_prefetch=0,
            grid=(1,),
            in_specs=[pl.BlockSpec((M, C), lambda i: (0, 0)),
                      pl.BlockSpec((M, C), lambda i: (0, 0))],
            out_specs=pl.BlockSpec((M, C), lambda i: (0, 0)),
        ),
        cost_estimate=pl.CostEstimate(flops=2 * M * C, transcendentals=0,
                                      bytes_accessed=12 * M * C),
    )(x.reshape(M, C), noise_t.reshape(M, C))
    return out.reshape(N, H, W, C)


# ----------------------------------------------------------------------------
# MaxPool2d (used only when maxpool1=True; k=1,s=1 path is the identity)
# ----------------------------------------------------------------------------
def _max_reduce_kernel(p_ref, o_ref):
    o_ref[...] = jnp.max(p_ref[...], axis=0)


def maxpool2d(x, k, stride, padding):
    N, H, W, C = x.shape
    if k == 1 and stride == 1 and padding == 0:
        return x
    Ho = (H + 2 * padding - k) // stride + 1
    Wo = (W + 2 * padding - k) // stride + 1
    xp = jnp.pad(x, ((0, 0), (padding, padding), (padding, padding), (0, 0)),
                 constant_values=-jnp.inf)
    planes = [xp[:, i:i + stride * Ho:stride, j:j + stride * Wo:stride, :]
              for i in range(k) for j in range(k)]
    M = N * Ho * Wo
    p = jnp.stack(planes, axis=0).reshape(k * k, M, C)
    out = pl.pallas_call(
        _max_reduce_kernel,
        out_shape=jax.ShapeDtypeStruct((M, C), x.dtype),
        grid_spec=pltpu.PrefetchScalarGridSpec(
            num_scalar_prefetch=0, grid=(1,),
            in_specs=[pl.BlockSpec((k * k, M, C), lambda i: (0, 0, 0))],
            out_specs=pl.BlockSpec((M, C), lambda i: (0, 0))),
    )(p)
    return out.reshape(N, Ho, Wo, C)


# ----------------------------------------------------------------------------
# AdaptiveAvgPool2d((1,1)) + flatten  ->  (N, C)
# ----------------------------------------------------------------------------
def _avgpool_kernel(x_ref, o_ref):
    o_ref[...] = jnp.mean(x_ref[...].astype(jnp.float32),
                          axis=1).astype(o_ref.dtype)


def adaptive_avgpool_1x1(x):
    N, H, W, C = x.shape
    return pl.pallas_call(
        _avgpool_kernel,
        out_shape=jax.ShapeDtypeStruct((N, C), x.dtype),
        grid_spec=pltpu.PrefetchScalarGridSpec(
            num_scalar_prefetch=0, grid=(1,),
            in_specs=[pl.BlockSpec((N, H * W, C), lambda i: (0, 0, 0))],
            out_specs=pl.BlockSpec((N, C), lambda i: (0, 0))),
        cost_estimate=pl.CostEstimate(flops=N * H * W * C, transcendentals=0,
                                      bytes_accessed=4 * (N * H * W * C + N * C)),
    )(x.reshape(N, H * W, C))


# ----------------------------------------------------------------------------
# Parameter init (BatchNorm folded ONCE to per-channel scale/shift)
# ----------------------------------------------------------------------------
def _fold_bn(gamma, beta, mean, var, eps=_BN_EPS):
    scale = gamma / jnp.sqrt(var + eps)
    shift = beta - mean * scale
    return scale.astype(jnp.float32), shift.astype(jnp.float32)


def _init_conv(key, kh, kw, cin, cout):
    std = math.sqrt(2.0 / (kh * kw * cin))
    return jax.random.normal(key, (kh, kw, cin, cout), jnp.float32) * std


def _init_bn(key, c):
    k1, k2, k3, k4 = jax.random.split(key, 4)
    gamma = 1.0 + 0.1 * jax.random.normal(k1, (c,), jnp.float32)
    beta = 0.1 * jax.random.normal(k2, (c,), jnp.float32)
    mean = 0.1 * jax.random.normal(k3, (c,), jnp.float32)
    var = 1.0 + 0.1 * jax.random.uniform(k4, (c,), jnp.float32)
    return _fold_bn(gamma, beta, mean, var)


class BasicBlock:
    expansion = 1

    def __init__(self, key, inplanes, planes, stride=1, downsample=False):
        keys = jax.random.split(key, 6)
        self.stride = stride
        self.conv1_w = _init_conv(keys[0], 3, 3, inplanes, planes)
        self.bn1 = _init_bn(keys[1], planes)
        self.conv2_w = _init_conv(keys[2], 3, 3, planes, planes)
        self.bn2 = _init_bn(keys[3], planes)
        self.downsample = None
        if downsample:
            self.downsample = (
                _init_conv(keys[4], 1, 1, inplanes, planes * self.expansion),
                _init_bn(keys[5], planes * self.expansion))

    def __call__(self, x):
        identity = x
        out = conv2d_bn_act(x, self.conv1_w, *self.bn1, stride=self.stride,
                            padding=1, act="relu")
        if self.downsample is not None:
            dw, dbn = self.downsample
            identity = conv2d_bn_act(x, dw, *dbn, stride=self.stride,
                                     padding=0, act="none")
        # second conv fuses BN + residual add + ReLU in the GEMM epilogue
        return conv2d_bn_act(out, self.conv2_w, *self.bn2, stride=1, padding=1,
                             act="relu", residual=identity)


class ResNetEncoder:
    """JAX/Pallas mirror of the PyTorch ResNetEncoder forward pass."""

    def __init__(self, block, layers, first_conv=False, maxpool1=False,
                 key=None):
        if key is None:
            key = jax.random.PRNGKey(0)
        assert block is BasicBlock  # TODO(synk): Bottleneck not implemented.
        self.inplanes = 64
        self.first_conv = first_conv
        self.maxpool1 = maxpool1
        keys = jax.random.split(key, 8)
        if first_conv:
            self.conv1_w = _init_conv(keys[0], 7, 7, 3, 64)
            self.conv1_stride, self.conv1_pad = 2, 3
        else:
            self.conv1_w = _init_conv(keys[0], 3, 3, 3, 64)
            self.conv1_stride, self.conv1_pad = 1, 1
        self.bn1 = _init_bn(keys[1], 64)
        self.layer1 = self._make_layer(keys[2], block, 64, layers[0])
        self.layer2 = self._make_layer(keys[3], block, 128, layers[1], stride=2)
        self.layer3 = self._make_layer(keys[4], block, 256, layers[2], stride=2)
        self.layer4 = self._make_layer(keys[5], block, 512, layers[3], stride=2)
        fan_in = 512 * block.expansion
        self.fc_w = jax.random.normal(keys[6], (fan_in, 10),
                                      jnp.float32) / math.sqrt(fan_in)
        self.fc_b = 0.01 * jax.random.normal(keys[7], (10,), jnp.float32)

    def _make_layer(self, key, block, planes, blocks, stride=1):
        keys = jax.random.split(key, blocks)
        downsample = stride != 1 or self.inplanes != planes * block.expansion
        layer = [block(keys[0], self.inplanes, planes, stride, downsample)]
        self.inplanes = planes * block.expansion
        for i in range(1, blocks):
            layer.append(block(keys[i], self.inplanes, planes))
        return layer

    def __call__(self, x_nchw, noise, noise_key):
        # NCHW (PyTorch convention) -> NHWC so channels map to TPU lanes.
        x = jnp.transpose(x_nchw, (0, 2, 3, 1))
        x = conv2d_bn_act(x, self.conv1_w, *self.bn1,
                          stride=self.conv1_stride, padding=self.conv1_pad,
                          act="sigmoid")                      # conv1+bn1+sigmoid
        if self.maxpool1:
            x = maxpool2d(x, 3, 2, 1)
        # else: MaxPool2d(kernel_size=1, stride=1) is the identity.
        noise_t = jax.random.normal(noise_key, x.shape, x.dtype)
        x = add_scaled_noise(x, noise_t, noise)               # x + randn * noise
        for blk in self.layer1:
            x = blk(x)
        for blk in self.layer2:
            x = blk(x)
        for blk in self.layer3:
            x = blk(x)
        for blk in self.layer4:
            x = blk(x)
        feat = adaptive_avgpool_1x1(x)                        # avgpool + flatten
        logits = gemm_bn_act(feat, self.fc_w,
                             jnp.ones((self.fc_w.shape[1],), jnp.float32),
                             self.fc_b, act="none")           # final_fc
        return feat, logits


# ----------------------------------------------------------------------------
# Pure-JAX reference (for numerical sanity check only)
# ----------------------------------------------------------------------------
def _ref_conv(x, w, stride, padding):
    return jax.lax.conv_general_dilated(
        x, w, window_strides=(stride, stride),
        padding=[(padding, padding), (padding, padding)],
        dimension_numbers=("NHWC", "HWIO", "NHWC"),
        precision=jax.lax.Precision.HIGHEST)


def _ref_block(blk, x):
    out = _ref_conv(x, blk.conv1_w, blk.stride, 1)
    out = jnp.maximum(out * blk.bn1[0] + blk.bn1[1], 0.0)
    if blk.downsample is not None:
        dw, dbn = blk.downsample
        identity = _ref_conv(x, dw, blk.stride, 0) * dbn[0] + dbn[1]
    else:
        identity = x
    out = _ref_conv(out, blk.conv2_w, 1, 1)
    return jnp.maximum(out * blk.bn2[0] + blk.bn2[1] + identity, 0.0)


def _ref_forward(enc, x_nchw, noise, noise_key):
    x = jnp.transpose(x_nchw, (0, 2, 3, 1))
    x = _ref_conv(x, enc.conv1_w, enc.conv1_stride, enc.conv1_pad)
    x = jax.nn.sigmoid(x * enc.bn1[0] + enc.bn1[1])
    if enc.maxpool1:
        x = jax.lax.reduce_window(x, -jnp.inf, jax.lax.max, (1, 3, 3, 1),
                                  (1, 2, 2, 1),
                                  [(0, 0), (1, 1), (1, 1), (0, 0)])
    noise_t = jax.random.normal(noise_key, x.shape, x.dtype)
    x = x + noise_t * noise
    for blk in enc.layer1 + enc.layer2 + enc.layer3 + enc.layer4:
        x = _ref_block(blk, x)
    feat = jnp.mean(x, axis=(1, 2))
    logits = jnp.dot(feat, enc.fc_w,
                     precision=jax.lax.Precision.HIGHEST) + enc.fc_b
    return feat, logits


if __name__ == "__main__":
    key = jax.random.PRNGKey(0)
    k_x, k_params, k_noise = jax.random.split(key, 3)

    x = jax.random.normal(k_x, (2, 3, 16, 16), jnp.float32)   # NCHW like PyTorch
    noise_sigma = 0.1

    enc = ResNetEncoder(BasicBlock, layers=[1, 1, 1, 1], key=k_params)
    feat, logits = enc(x, noise_sigma, k_noise)
    feat, logits = jax.block_until_ready((feat, logits))

    assert feat.shape == (2, 512), feat.shape
    assert logits.shape == (2, 10), logits.shape

    ref_feat, ref_logits = _ref_forward(enc, x, noise_sigma, k_noise)
    assert jnp.allclose(feat, ref_feat, rtol=1e-2, atol=1e-2), \
        float(jnp.max(jnp.abs(feat - ref_feat)))
    assert jnp.allclose(logits, ref_logits, rtol=1e-2, atol=1e-2), \
        float(jnp.max(jnp.abs(logits - ref_logits)))

    print("KERNEL_OK")
</pallas_src>

<mosaic_0001>
module attributes {stable_mosaic.version = 11 : i64} {
  func.func @_gemm_bn_act_kernel(%arg0: i32, %arg1: i32, %arg2: memref<128x32xf32, #tpu.memory_space<vmem>>, %arg3: memref<32x64xf32, #tpu.memory_space<vmem>>, %arg4: memref<1x64xf32, #tpu.memory_space<vmem>>, %arg5: memref<1x64xf32, #tpu.memory_space<vmem>>, %arg6: memref<128x64xf32, #tpu.memory_space<vmem>>) attributes {dimension_semantics = [#tpu.dimension_semantics<parallel>, #tpu.dimension_semantics<parallel>], iteration_bounds = array<i64: 4, 1>, scalar_prefetch = 0 : i64, scratch_operands = 0 : i64, tpu.core_type = #tpu.core_type<tc>, window_params = [{transform_indices = @transform_0, window_bounds = array<i64: 128, 32>}, {transform_indices = @transform_1, window_bounds = array<i64: 32, 64>}, {transform_indices = @transform_2, window_bounds = array<i64: 1, 64>}, {transform_indices = @transform_3, window_bounds = array<i64: 1, 64>}, {transform_indices = @transform_4, window_bounds = array<i64: 128, 64>}]} {
    %c0 = arith.constant 0 : index
    %c0_0 = arith.constant 0 : index
    %0 = vector.load %arg2[%c0, %c0_0] : memref<128x32xf32, #tpu.memory_space<vmem>>, vector<128x32xf32>
    %c0_1 = arith.constant 0 : index
    %c0_2 = arith.constant 0 : index
    %1 = vector.load %arg3[%c0_1, %c0_2] : memref<32x64xf32, #tpu.memory_space<vmem>>, vector<32x64xf32>
    %cst = arith.constant dense<0.000000e+00> : vector<128x64xf32>
    %2 = tpu.matmul %0, %1, %cst {dimension_numbers = #tpu.dot_dimension_numbers<[1], [0], [0], [1], [0, 0, 1, 1], [], []>} : vector<128x32xf32>, vector<32x64xf32>, vector<128x64xf32> -> vector<128x64xf32>
    %c0_3 = arith.constant 0 : index
    %c0_4 = arith.constant 0 : index
    %3 = vector.load %arg4[%c0_3, %c0_4] : memref<1x64xf32, #tpu.memory_space<vmem>>, vector<1x64xf32>
    %4 = vector.broadcast %3 : vector<1x64xf32> to vector<128x64xf32>
    %5 = arith.mulf %2, %4 : vector<128x64xf32>
    %c0_5 = arith.constant 0 : index
    %c0_6 = arith.constant 0 : index
    %6 = vector.load %arg5[%c0_5, %c0_6] : memref<1x64xf32, #tpu.memory_space<vmem>>, vector<1x64xf32>
    %7 = vector.broadcast %6 : vector<1x64xf32> to vector<128x64xf32>
    %8 = arith.addf %5, %7 : vector<128x64xf32>
    %cst_7 = arith.constant 0.000000e+00 : f32
    %9 = vector.broadcast %cst_7 : f32 to vector<128x64xf32>
    %10 = arith.subf %9, %8 : vector<128x64xf32>
    %11 = math.exp %10 : vector<128x64xf32>
    %cst_8 = arith.constant 1.000000e+00 : f32
    %12 = vector.broadcast %cst_8 : f32 to vector<128x64xf32>
    %13 = arith.addf %12, %11 : vector<128x64xf32>
    %cst_9 = arith.constant 1.000000e+00 : f32
    %14 = vector.broadcast %cst_9 : f32 to vector<128x64xf32>
    %15 = arith.divf %14, %13 : vector<128x64xf32>
    %c0_10 = arith.constant 0 : index
    %c0_11 = arith.constant 0 : index
    %16 = vector.load %arg6[%c0_10, %c0_11] : memref<128x64xf32, #tpu.memory_space<vmem>>, vector<128x64xf32>
    tpu.vector_store %arg6[%c0_10, %c0_11], %15 {strides = array<i32>} : memref<128x64xf32, #tpu.memory_space<vmem>>, vector<128x64xf32>,
    return
  }
  func.func @transform_0(%arg0: i32, %arg1: i32) -> (i32, i32) {
    %c0_i32 = arith.constant 0 : i32
    %c0_i32_0 = arith.constant 0 : i32
    return %arg0, %c0_i32 : i32, i32
  }
  func.func @transform_1(%arg0: i32, %arg1: i32) -> (i32, i32) {
    %c0_i32 = arith.constant 0 : i32
    %c0_i32_0 = arith.constant 0 : i32
    return %c0_i32, %arg1 : i32, i32
  }
  func.func @transform_2(%arg0: i32, %arg1: i32) -> (i32, i32) {
    %c0_i32 = arith.constant 0 : i32
    %c0_i32_0 = arith.constant 0 : i32
    return %c0_i32, %arg1 : i32, i32
  }
  func.func @transform_3(%arg0: i32, %arg1: i32) -> (i32, i32) {
    %c0_i32 = arith.constant 0 : i32
    %c0_i32_0 = arith.constant 0 : i32
    return %c0_i32, %arg1 : i32, i32
  }
  func.func @transform_4(%arg0: i32, %arg1: i32) -> (i32, i32) {
    %c0_i32 = arith.constant 0 : i32
    return %arg0, %arg1 : i32, i32
  }
}

</mosaic_0001>

<llo_original>
// kernel: tpu_custom_call.1
$region0: #{tpu_custom_call.1}
  #allocation0 [shape = 'u32[]', space=smem, size = 0x4, offset = 0x4, fixed_abs, tag = 'smem constant byte address 0x4 - core index']
  #allocation1 [shape = 'u32[144,128]{1,0:T(1,128)}', space=vmem, size = 0x12000, scoped, tag = 'internal scratch']
  %s0 = inlined_call_operand.vmem [shape: f32[512,32], index: 0, kind: input, shape index: {}]
  %s1 = inlined_call_operand.vmem [shape: f32[32,64], index: 1, kind: input, shape index: {}]
  %s2 = inlined_call_operand.vmem [shape: f32[1,64], index: 2, kind: input, shape index: {}]
  %s3 = inlined_call_operand.vmem [shape: f32[1,64], index: 3, kind: input, shape index: {}]
  %s4 = inlined_call_operand.vmem [shape: f32[512,64], index: 4, kind: output, shape index: {}]
  %s5 = sld [smem:[#allocation0]]
  $region49: #{tpu_custom_call.1} parent=0
    _
  %s7 = ssub.s32 1, %s5
  %s8 = scalar_select 0, %s7, %s5
  loop: start=0, step=1, limit=6
  $region2: #{tpu_custom_call.1} parent=0 // loop_pre_header
    _
  $region3: #{tpu_custom_call.1} parent=0 // loop_header
    %s10 = sphi 0, %s14
    %p11 = scmp.ge.s32.totalorder %s10, 6
    %s17 = sphi 0, %s29
    %s18 = sphi 0, %s25
    %s19 = sphi 0, %s17
    %s20 = sphi 0, %s18
    %s21 = sphi 0, %s19
    %s22 = sphi 0, %s20
    %s32 = sphi 0, %s34
    %s35 = sphi 0, %s32
    %s36 = sphi 0, %s35
    %s52 = sphi 0, %s36
    %s58 = sphi 0, %s60
    %s61 = sphi 0, %s58
    %s62 = sphi 0, %s61
    %s78 = sphi 0, %s62
    %s84 = sphi 0, %s86
    %s87 = sphi 0, %s84
    %s88 = sphi 0, %s87
    %s104 = sphi 0, %s88
    %s110 = sphi 0, %s112
    %s113 = sphi 0, %s110
    %s114 = sphi 0, %s113
    %s130 = sphi 0, %s114
    %s138 = sphi 0, %s140
    %s141 = sphi 0, %s138
    %s142 = sphi 0, %s141
    %s158 = sphi 0, %s142
  $region4: #{tpu_custom_call.1} parent=0 // loop_header_branch
    %13 = sbr.rel (%p11) target = $region8
  $region5: #{tpu_custom_call.1} parent=0 // loop_body
    %s15 = ssub.s32 %s10, 1
    %s16 = ssub.s32 %s10, 2
    %s23 = sadd.s32 1, %s18
    %p24 = scmp.ge.s32.totalorder %s23, 1
    %s25 = scalar_select %p24, 0, %s23
    %s26 = sadd.s32 1, %s17
    %s27 = scalar_select %p24, %s26, %s17
    %p28 = scmp.ge.s32.totalorder %s27, 4
    %s29 = scalar_select %p28, 0, %s27
    %s30 = ssub.s32 %s17, %s29
    %p31 = scmp.eq.s32.totalorder %s30, 0
    %s33 = sadd.s32 %s32, 1
    %s34 = scalar_select %p31, %s32, %s33
    %p37 = pneg %p31
    %p38 = scmp.eq.s32.totalorder %s10, 3
    %p39 = por %p37, %p38
    %p40 = scmp.ne.s32.totalorder %s32, %s35
    %p41 = scmp.eq.s32.totalorder %s10, 0
    %p42 = por %p40, %p41
    %p43 = scmp.ne.s32.totalorder %s32, %s35
    %p44 = scmp.eq.s32.totalorder %s15, 3
    %p45 = por %p43, %p44
    %p46 = scmp.ne.s32.totalorder %s35, %s36
    %p47 = scmp.eq.s32.totalorder %s15, 0
    %p48 = por %p46, %p47
    %p49 = scmp.ne.s32.totalorder %s35, %s36
    %p50 = scmp.eq.s32.totalorder %s16, 3
    %p51 = por %p49, %p50
    %p53 = scmp.ne.s32.totalorder %s36, %s52
    %p54 = scmp.eq.s32.totalorder %s16, 0
    %p55 = por %p53, %p54
    %s56 = ssub.s32 %s18, %s25
    %p57 = scmp.eq.s32.totalorder %s56, 0
    %s59 = sadd.s32 %s58, 1
    %s60 = scalar_select %p57, %s58, %s59
    %p63 = pneg %p57
    %p64 = scmp.eq.s32.totalorder %s10, 3
    %p65 = por %p63, %p64
    %p66 = scmp.ne.s32.totalorder %s58, %s61
    %p67 = scmp.eq.s32.totalorder %s10, 0
    %p68 = por %p66, %p67
    %p69 = scmp.ne.s32.totalorder %s58, %s61
    %p70 = scmp.eq.s32.totalorder %s15, 3
    %p71 = por %p69, %p70
    %p72 = scmp.ne.s32.totalorder %s61, %s62
    %p73 = scmp.eq.s32.totalorder %s15, 0
    %p74 = por %p72, %p73
    %p75 = scmp.ne.s32.totalorder %s61, %s62
    %p76 = scmp.eq.s32.totalorder %s16, 3
    %p77 = por %p75, %p76
    %p79 = scmp.ne.s32.totalorder %s62, %s78
    %p80 = scmp.eq.s32.totalorder %s16, 0
    %p81 = por %p79, %p80
    %s82 = ssub.s32 %s18, %s25
    %p83 = scmp.eq.s32.totalorder %s82, 0
    %s85 = sadd.s32 %s84, 1
    %s86 = scalar_select %p83, %s84, %s85
    %p89 = pneg %p83
    %p90 = scmp.eq.s32.totalorder %s10, 3
    %p91 = por %p89, %p90
    %p92 = scmp.ne.s32.totalorder %s84, %s87
    %p93 = scmp.eq.s32.totalorder %s10, 0
    %p94 = por %p92, %p93
    %p95 = scmp.ne.s32.totalorder %s84, %s87
    %p96 = scmp.eq.s32.totalorder %s15, 3
    %p97 = por %p95, %p96
    %p98 = scmp.ne.s32.totalorder %s87, %s88
    %p99 = scmp.eq.s32.totalorder %s15, 0
    %p100 = por %p98, %p99
    %p101 = scmp.ne.s32.totalorder %s87, %s88
    %p102 = scmp.eq.s32.totalorder %s16, 3
    %p103 = por %p101, %p102
    %p105 = scmp.ne.s32.totalorder %s88, %s104
    %p106 = scmp.eq.s32.totalorder %s16, 0
    %p107 = por %p105, %p106
    %s108 = ssub.s32 %s18, %s25
    %p109 = scmp.eq.s32.totalorder %s108, 0
    %s111 = sadd.s32 %s110, 1
    %s112 = scalar_select %p109, %s110, %s111
    %p115 = pneg %p109
    %p116 = scmp.eq.s32.totalorder %s10, 3
    %p117 = por %p115, %p116
    %p118 = scmp.ne.s32.totalorder %s110, %s113
    %p119 = scmp.eq.s32.totalorder %s10, 0
    %p120 = por %p118, %p119
    %p121 = scmp.ne.s32.totalorder %s110, %s113
    %p122 = scmp.eq.s32.totalorder %s15, 3
    %p123 = por %p121, %p122
    %p124 = scmp.ne.s32.totalorder %s113, %s114
    %p125 = scmp.eq.s32.totalorder %s15, 0
    %p126 = por %p124, %p125
    %p127 = scmp.ne.s32.totalorder %s113, %s114
    %p128 = scmp.eq.s32.totalorder %s16, 3
    %p129 = por %p127, %p128
    %p131 = scmp.ne.s32.totalorder %s114, %s130
    %p132 = scmp.eq.s32.totalorder %s16, 0
    %p133 = por %p131, %p132
    %s134 = ssub.s32 %s17, %s29
    %s135 = ssub.s32 %s18, %s25
    %s136 = sor.u32 %s134, %s135
    %p137 = scmp.eq.s32.totalorder %s136, 0
    %s139 = sadd.s32 %s138, 1
    %s140 = scalar_select %p137, %s138, %s139
    %p143 = pneg %p137
    %p144 = scmp.eq.s32.totalorder %s10, 3
    %p145 = por %p143, %p144
    %p146 = scmp.ne.s32.totalorder %s138, %s141
    %p147 = scmp.eq.s32.totalorder %s10, 0
    %p148 = por %p146, %p147
    %p149 = scmp.ne.s32.totalorder %s138, %s141
    %p150 = scmp.eq.s32.totalorder %s15, 3
    %p151 = por %p149, %p150
    %p152 = scmp.ne.s32.totalorder %s141, %s142
    %p153 = scmp.eq.s32.totalorder %s15, 0
    %p154 = por %p152, %p153
    %p155 = scmp.ne.s32.totalorder %s141, %s142
    %p156 = scmp.eq.s32.totalorder %s16, 3
    %p157 = por %p155, %p156
    %p159 = scmp.ne.s32.totalorder %s142, %s158
    %p160 = scmp.eq.s32.totalorder %s16, 0
    %p161 = por %p159, %p160
    %p162 = scmp.le.s32.totalorder 1, %s10
    %p163 = scmp.lt.s32.totalorder %s10, 5
    %p164 = pnand %p162, %p163
    %p165 = pneg %p164
    // Predicated region
    $region9: #{tpu_custom_call.1} parent=5 // pred_check
      _
    $region10: #{tpu_custom_call.1} parent=5 // pred_check_branch
      %167 = sbr.rel (%p164) target = $region12
    $region11: #{tpu_custom_call.1} parent=5 // pred_region
      %s168 = ssub.s32 %s10, 1
      // Predicated region
      $region13: #{tpu_custom_call.1} parent=11 // pred_check
        %p169 = pneg %p74
      $region14: #{tpu_custom_call.1} parent=11 // pred_check_branch
        %171 = sbr.rel (%p169) target = $region16
      $region15: #{tpu_custom_call.1} parent=11 // pred_region
        %p172 = scmp.lt.s32.totalorder %s20, 0
        %s173 = scalar_select %p172, %s20, 0
        %s174 = smul.addr %s173, 8
        %s175 = scalar_lea.vmem %s1, %s174
      $region16: #{tpu_custom_call.1} parent=11 // pred_fallthru
        _
      // Predicated region
      $region17: #{tpu_custom_call.1} parent=11 // pred_check
        %p176 = pneg %p100
      $region18: #{tpu_custom_call.1} parent=11 // pred_check_branch
        %178 = sbr.rel (%p176) target = $region20
      $region19: #{tpu_custom_call.1} parent=11 // pred_region
        %p179 = scmp.lt.s32.totalorder %s20, 0
        %s180 = scalar_select %p179, %s20, 0
        %s181 = scalar_lea.vmem %s2, %s180
      $region20: #{tpu_custom_call.1} parent=11 // pred_fallthru
        _
      // Predicated region
      $region21: #{tpu_custom_call.1} parent=11 // pred_check
        %p182 = pneg %p126
      $region22: #{tpu_custom_call.1} parent=11 // pred_check_branch
        %184 = sbr.rel (%p182) target = $region24
      $region23: #{tpu_custom_call.1} parent=11 // pred_region
        %p185 = scmp.lt.s32.totalorder %s20, 0
        %s186 = scalar_select %p185, %s20, 0
        %s187 = scalar_lea.vmem %s3, %s186
      $region24: #{tpu_custom_call.1} parent=11 // pred_fallthru
        _
    $region12: #{tpu_custom_call.1} parent=5 // pred_fallthru
      _
    %p188 = scmp.lt.s32.totalorder %s10, 4
    // Predicated region
    $region25: #{tpu_custom_call.1} parent=5 // pred_check
      %p189 = pneg %p188
    $region26: #{tpu_custom_call.1} parent=5 // pred_check_branch
      %191 = sbr.rel (%p189) target = $region28
    $region27: #{tpu_custom_call.1} parent=5 // pred_region
      // Predicated region
      $region29: #{tpu_custom_call.1} parent=27 // pred_check
        %p192 = pneg %p42
      $region30: #{tpu_custom_call.1} parent=27 // pred_check_branch
        %194 = sbr.rel (%p192) target = $region32
      $region31: #{tpu_custom_call.1} parent=27 // pred_region
        %s195 = smul.u32 16, %s17
        %p196 = scmp.lt.s32.totalorder %s195, 63
        %s197 = scalar_select %p196, %s195, 63
        %s198 = smul.addr %s197, 8
        %s199 = scalar_lea.vmem %s0, %s198
        %s200 = smul.u32 16, %s17
      $region32: #{tpu_custom_call.1} parent=27 // pred_fallthru
        _
    $region28: #{tpu_custom_call.1} parent=5 // pred_fallthru
      _
    %p201 = scmp.le.s32.totalorder 1, %s10
    %p202 = scmp.lt.s32.totalorder %s10, 5
    %p203 = pnand %p201, %p202
    %p204 = pneg %p203
    // Predicated region
    $region33: #{tpu_custom_call.1} parent=5 // pred_check
      _
    $region34: #{tpu_custom_call.1} parent=5 // pred_check_branch
      %206 = sbr.rel (%p203) target = $region36
    $region35: #{tpu_custom_call.1} parent=5 // pred_region
      %s207 = ssub.s32 %s10, 1
      %s208 = smul.u32 16, %s19
      %p209 = scmp.lt.s32.totalorder %s208, 63
      %s210 = scalar_select %p209, %s208, 63
      %s211 = smul.addr %s210, 8
      %s212 = scalar_lea.vmem %s0, %s211
      %p213 = pneg %p48
      %p214 = pneg %p45
      %p215 = scmp.lt.s32.totalorder %s20, 0
      %s216 = scalar_select %p215, %s20, 0
      %s217 = smul.addr %s216, 8
      %s218 = scalar_lea.vmem %s1, %s217
      %p219 = pneg %p74
      %p220 = pneg %p71
      %p221 = scmp.lt.s32.totalorder %s20, 0
      %s222 = scalar_select %p221, %s20, 0
      %s223 = scalar_lea.vmem %s2, %s222
      %p224 = pneg %p100
      %p225 = pneg %p97
      %p226 = scmp.lt.s32.totalorder %s20, 0
      %s227 = scalar_select %p226, %s20, 0
      %s228 = scalar_lea.vmem %s3, %s227
      %p229 = pneg %p126
      %p230 = pneg %p123
      %p231 = pneg %p154
      %p232 = pneg %p151
      %s233 = smul.u32 16, %s19
      %p234 = scmp.lt.s32.totalorder %s233, 63
      %s235 = scalar_select %p234, %s233, 63
      %p236 = scmp.lt.s32.totalorder %s20, 0
      %s237 = scalar_select %p236, %s20, 0
      %s238 = sadd.s32 %s237, %s235
      %s239 = smul.addr %s238, 8
      %s240 = scalar_lea.vmem %s4, %s239
      %s241 = smul.u32 16, %s19
      %p242 = scmp.lt.s32.totalorder %s241, 63
      %s243 = scalar_select %p242, %s241, 63
      %s244 = smul.addr %s243, 8
      %s245 = scalar_lea.vmem %s0, %s244
      %s246 = smul.u32 16, %s19
      %p247 = scmp.lt.s32.totalorder %s20, 0
      %s248 = scalar_select %p247, %s20, 0
      %s249 = smul.addr %s248, 8
      %s250 = scalar_lea.vmem %s1, %s249
      %p251 = scmp.lt.s32.totalorder %s20, 0
      %s252 = scalar_select %p251, %s20, 0
      %s253 = scalar_lea.vmem %s2, %s252
      %p254 = scmp.lt.s32.totalorder %s20, 0
      %s255 = scalar_select %p254, %s20, 0
      %s256 = scalar_lea.vmem %s3, %s255
      %s257 = smul.u32 16, %s19
      %p258 = scmp.lt.s32.totalorder %s257, 63
      %s259 = scalar_select %p258, %s257, 63
      %p260 = scmp.lt.s32.totalorder %s20, 0
      %s261 = scalar_select %p260, %s20, 0
      %s262 = sadd.s32 %s261, %s259
      %s263 = smul.addr %s262, 8
      %s264 = scalar_lea.vmem %s4, %s263
      %s265 = smul.u32 16, %s19
      %v266 = vld [vmem:[%s245] sm:$0xff]
      %v267 = vld [vmem:[%s245 + $0x8] sm:$0xff]
      %v268 = vld [vmem:[%s245 + $0x10] sm:$0xff]
      %v269 = vld [vmem:[%s245 + $0x18] sm:$0xff]
      %v270 = vld [vmem:[%s245 + $0x20] sm:$0xff]
      %v271 = vld [vmem:[%s245 + $0x28] sm:$0xff]
      %v272 = vld [vmem:[%s245 + $0x30] sm:$0xff]
      %v273 = vld [vmem:[%s245 + $0x38] sm:$0xff]
      %v274 = vld [vmem:[%s245 + $0x40] sm:$0xff]
      %v275 = vld [vmem:[%s245 + $0x48] sm:$0xff]
      %v276 = vld [vmem:[%s245 + $0x50] sm:$0xff]
      %v277 = vld [vmem:[%s245 + $0x58] sm:$0xff]
      %v278 = vld [vmem:[%s245 + $0x60] sm:$0xff]
      %v279 = vld [vmem:[%s245 + $0x68] sm:$0xff]
      %v280 = vld [vmem:[%s245 + $0x70] sm:$0xff]
      %v281 = vld [vmem:[%s245 + $0x78] sm:$0xff]
      %v282 = vld [vmem:[%s250] sm:$0xff]
      %v283 = vld [vmem:[%s250 + $0x8] sm:$0xff]
      %v284 = vld [vmem:[%s250 + $0x10] sm:$0xff]
      %v285 = vld [vmem:[%s250 + $0x18] sm:$0xff]
      %vm286 = vcmask 261120
      %v288 = vsel %vm286, %v266, 0
      %v291 = vsel %vm286, %v267, 0
      %v294 = vsel %vm286, %v268, 0
      %v297 = vsel %vm286, %v269, 0
      %v300 = vsel %vm286, %v270, 0
      %v303 = vsel %vm286, %v271, 0
      %v306 = vsel %vm286, %v272, 0
      %v309 = vsel %vm286, %v273, 0
      %v312 = vsel %vm286, %v274, 0
      %v315 = vsel %vm286, %v275, 0
      %v318 = vsel %vm286, %v276, 0
      %v321 = vsel %vm286, %v277, 0
      %v324 = vsel %vm286, %v278, 0
      %v327 = vsel %vm286, %v279, 0
      %v330 = vsel %vm286, %v280, 0
      %v333 = vsel %vm286, %v281, 0
      %335 = vmatprep.subr.mxu0 0.0
      %336 = vmatpush1.msra.mxu0 %v282
      %337 = vmatprep.subr.mxu0 0.0
      %338 = vmatpush1.msra.mxu0 %v283
      %339 = vmatprep.subr.mxu0 0.0
      %340 = vmatpush1.msra.mxu0 %v284
      %341 = vmatprep.subr.mxu0 0.0
      %342 = vmatpush1.msra.mxu0 %v285
      %343 = vmatprep.subr.mxu0 0.0
      %344 = vmatpush1.msra.mxu0 0.0
      %345 = vmatprep.subr.mxu0 0.0
      %346 = vmatpush1.msra.mxu0 0.0
      %347 = vmatprep.subr.mxu0 0.0
      %348 = vmatpush1.msra.mxu0 0.0
      %349 = vmatprep.subr.mxu0 0.0
      %350 = vmatpush1.msra.mxu0 0.0
      %351 = vmatprep.subr.mxu0 0.0
      %352 = vmatpush1.msra.mxu0 0.0
      %353 = vmatprep.subr.mxu0 0.0
      %354 = vmatpush1.msra.mxu0 0.0
      %355 = vmatprep.subr.mxu0 0.0
      %356 = vmatpush1.msra.mxu0 0.0
      %357 = vmatprep.subr.mxu0 0.0
      %358 = vmatpush1.msra.mxu0 0.0
      %359 = vmatprep.subr.mxu0 0.0
      %360 = vmatpush1.msra.mxu0 0.0
      %361 = vmatprep.subr.mxu0 0.0
      %362 = vmatpush1.msra.mxu0 0.0
      %363 = vmatprep.subr.mxu0 0.0
      %364 = vmatpush1.msra.mxu0 0.0
      %365 = vmatprep.subr.mxu0 0.0
      %366 = vmatpush1.msra.mxu0 0.0
      %367 = vmatprep.subr.mxu0 0.0
      %368 = vmatpush1.msra.mxu0 0.0
      %369 = vmatprep.subr.mxu0 0.0
      %370 = vmatpush1.msra.mxu0 0.0
      %371 = vmatprep.subr.mxu0 0.0
      %372 = vmatpush1.msra.mxu0 0.0
      %373 = vmatprep.subr.mxu0 0.0
      %374 = vmatpush1.msra.mxu0 0.0
      %375 = vmatprep.subr.mxu0 0.0
      %376 = vmatpush1.msra.mxu0 0.0
      %377 = vmatprep.subr.mxu0 0.0
      %378 = vmatpush1.msra.mxu0 0.0
      %379 = vmatprep.subr.mxu0 0.0
      %380 = vmatpush1.msra.mxu0 0.0
      %381 = vmatprep.subr.mxu0 0.0
      %382 = vmatpush1.msra.mxu0 0.0
      %383 = vmatprep.subr.mxu0 0.0
      %384 = vmatpush1.msra.mxu0 0.0
      %385 = vmatprep.subr.mxu0 0.0
      %386 = vmatpush1.msra.mxu0 0.0
      %387 = vmatprep.subr.mxu0 0.0
      %388 = vmatpush1.msra.mxu0 0.0
      %389 = vmatprep.subr.mxu0 0.0
      %390 = vmatpush1.msra.mxu0 0.0
      %391 = vmatprep.subr.mxu0 0.0
      %392 = vmatpush1.msra.mxu0 0.0
      %393 = vmatprep.subr.mxu0 0.0
      %394 = vmatpush1.msra.mxu0 0.0
      %395 = vmatprep.subr.mxu0 0.0
      %396 = vmatpush1.msra.mxu0 0.0
      %397 = vmatprep.subr.mxu0 0.0
      %398 = vmatpush1.msra.mxu0 0.0
      %399 = vmatprep.mubr.f32.mxu0 0.0
      %400 = vmatmul.mubr.f32.gmra.mrb[0].mxu0 %v288
      %v401 = vpop.f32.mrb[0].mxu0
      %v402 = vadd.f32 0.0, %v401
      %v403 = vpop.f32.mrb[0].mxu0
      %404 = vmatprep.mubr.f32.mxu0 0.0
      %405 = vmatmul.mubr.f32.gmra.mrb[0].mxu0 %v291
      %v406 = vpop.f32.mrb[0].mxu0
      %v407 = vadd.f32 0.0, %v406
      %v408 = vpop.f32.mrb[0].mxu0
      %409 = vmatprep.mubr.f32.mxu0 0.0
      %410 = vmatmul.mubr.f32.gmra.mrb[0].mxu0 %v294
      %v411 = vpop.f32.mrb[0].mxu0
      %v412 = vadd.f32 0.0, %v411
      %v413 = vpop.f32.mrb[0].mxu0
      %414 = vmatprep.mubr.f32.mxu0 0.0
      %415 = vmatmul.mubr.f32.gmra.mrb[0].mxu0 %v297
      %v416 = vpop.f32.mrb[0].mxu0
      %v417 = vadd.f32 0.0, %v416
      %v418 = vpop.f32.mrb[0].mxu0
      %419 = vmatprep.mubr.f32.mxu0 0.0
      %420 = vmatmul.mubr.f32.gmra.mrb[0].mxu0 %v300
      %v421 = vpop.f32.mrb[0].mxu0
      %v422 = vadd.f32 0.0, %v421
      %v423 = vpop.f32.mrb[0].mxu0
      %424 = vmatprep.mubr.f32.mxu0 0.0
      %425 = vmatmul.mubr.f32.gmra.mrb[0].mxu0 %v303
      %v426 = vpop.f32.mrb[0].mxu0
      %v427 = vadd.f32 0.0, %v426
      %v428 = vpop.f32.mrb[0].mxu0
      %429 = vmatprep.mubr.f32.mxu0 0.0
      %430 = vmatmul.mubr.f32.gmra.mrb[0].mxu0 %v306
      %v431 = vpop.f32.mrb[0].mxu0
      %v432 = vadd.f32 0.0, %v431
      %v433 = vpop.f32.mrb[0].mxu0
      %434 = vmatprep.mubr.f32.mxu0 0.0
      %435 = vmatmul.mubr.f32.gmra.mrb[0].mxu0 %v309
      %v436 = vpop.f32.mrb[0].mxu0
      %v437 = vadd.f32 0.0, %v436
      %v438 = vpop.f32.mrb[0].mxu0
      %439 = vmatprep.mubr.f32.mxu0 0.0
      %440 = vmatmul.mubr.f32.gmra.mrb[0].mxu0 %v312
      %v441 = vpop.f32.mrb[0].mxu0
      %v442 = vadd.f32 0.0, %v441
      %v443 = vpop.f32.mrb[0].mxu0
      %444 = vmatprep.mubr.f32.mxu0 0.0
      %445 = vmatmul.mubr.f32.gmra.mrb[0].mxu0 %v315
      %v446 = vpop.f32.mrb[0].mxu0
      %v447 = vadd.f32 0.0, %v446
      %v448 = vpop.f32.mrb[0].mxu0
      %449 = vmatprep.mubr.f32.mxu0 0.0
      %450 = vmatmul.mubr.f32.gmra.mrb[0].mxu0 %v318
      %v451 = vpop.f32.mrb[0].mxu0
      %v452 = vadd.f32 0.0, %v451
      %v453 = vpop.f32.mrb[0].mxu0
      %454 = vmatprep.mubr.f32.mxu0 0.0
      %455 = vmatmul.mubr.f32.gmra.mrb[0].mxu0 %v321
      %v456 = vpop.f32.mrb[0].mxu0
      %v457 = vadd.f32 0.0, %v456
      %v458 = vpop.f32.mrb[0].mxu0
      %459 = vmatprep.mubr.f32.mxu0 0.0
      %460 = vmatmul.mubr.f32.gmra.mrb[0].mxu0 %v324
      %v461 = vpop.f32.mrb[0].mxu0
      %v462 = vadd.f32 0.0, %v461
      %v463 = vpop.f32.mrb[0].mxu0
      %464 = vmatprep.mubr.f32.mxu0 0.0
      %465 = vmatmul.mubr.f32.gmra.mrb[0].mxu0 %v327
      %v466 = vpop.f32.mrb[0].mxu0
      %v467 = vadd.f32 0.0, %v466
      %v468 = vpop.f32.mrb[0].mxu0
      %469 = vmatprep.mubr.f32.mxu0 0.0
      %470 = vmatmul.mubr.f32.gmra.mrb[0].mxu0 %v330
      %v471 = vpop.f32.mrb[0].mxu0
      %v472 = vadd.f32 0.0, %v471
      %v473 = vpop.f32.mrb[0].mxu0
      %474 = vmatprep.mubr.f32.mxu0 0.0
      %475 = vmatmul.mubr.f32.gmra.mrb[0].mxu0 %v333
      %v476 = vpop.f32.mrb[0].mxu0
      %v477 = vadd.f32 0.0, %v476
      %v478 = vpop.f32.mrb[0].mxu0
      %479 = vdwg.mxu0
      %v480 = vld [vmem:[%s253] sm:$0x1]
      %v482 = vlaneseq
      %v483 = vshrl.u32 %v482, 7
      %v484 = vsub.s32 0, %v483
      %v485 = vrot.slane %v480, %v484
      %v487 = vmul.f32 %v402, %v485
      %v488 = vmul.f32 %v407, %v485
      %v489 = vmul.f32 %v412, %v485
      %v490 = vmul.f32 %v417, %v485
      %v491 = vmul.f32 %v422, %v485
      %v492 = vmul.f32 %v427, %v485
      %v493 = vmul.f32 %v432, %v485
      %v494 = vmul.f32 %v437, %v485
      %v495 = vmul.f32 %v442, %v485
      %v496 = vmul.f32 %v447, %v485
      %v497 = vmul.f32 %v452, %v485
      %v498 = vmul.f32 %v457, %v485
      %v499 = vmul.f32 %v462, %v485
      %v500 = vmul.f32 %v467, %v485
      %v501 = vmul.f32 %v472, %v485
      %v502 = vmul.f32 %v477, %v485
      %v503 = vld [vmem:[%s256] sm:$0x1]
      %v505 = vlaneseq
      %v506 = vshrl.u32 %v505, 7
      %v507 = vsub.s32 0, %v506
      %v508 = vrot.slane %v503, %v507
      %v510 = vadd.f32 %v487, %v508
      %v511 = vadd.f32 %v488, %v508
      %v512 = vadd.f32 %v489, %v508
      %v513 = vadd.f32 %v490, %v508
      %v514 = vadd.f32 %v491, %v508
      %v515 = vadd.f32 %v492, %v508
      %v516 = vadd.f32 %v493, %v508
      %v517 = vadd.f32 %v494, %v508
      %v518 = vadd.f32 %v495, %v508
      %v519 = vadd.f32 %v496, %v508
      %v520 = vadd.f32 %v497, %v508
      %v521 = vadd.f32 %v498, %v508
      %v522 = vadd.f32 %v499, %v508
      %v523 = vadd.f32 %v500, %v508
      %v524 = vadd.f32 %v501, %v508
      %v525 = vadd.f32 %v502, %v508
      %v526 = vsub.f32 0.0, %v510
      %v527 = vsub.f32 0.0, %v511
      %v528 = vsub.f32 0.0, %v512
      %v529 = vsub.f32 0.0, %v513
      %v530 = vsub.f32 0.0, %v514
      %v531 = vsub.f32 0.0, %v515
      %v532 = vsub.f32 0.0, %v516
      %v533 = vsub.f32 0.0, %v517
      %v534 = vsub.f32 0.0, %v518
      %v535 = vsub.f32 0.0, %v519
      %v536 = vsub.f32 0.0, %v520
      %v537 = vsub.f32 0.0, %v521
      %v538 = vsub.f32 0.0, %v522
      %v539 = vsub.f32 0.0, %v523
      %v540 = vsub.f32 0.0, %v524
      %v541 = vsub.f32 0.0, %v525
      %v542 = vmul.f32 %v526, 1.442695
      %v543 = vpow.pop %v542
      %v544 = vmul.f32 %v527, 1.442695
      %v545 = vpow.pop %v544
      %v546 = vmul.f32 %v528, 1.442695
      %v547 = vpow.pop %v546
      %v548 = vmul.f32 %v529, 1.442695
      %v549 = vpow.pop %v548
      %v550 = vmul.f32 %v530, 1.442695
      %v551 = vpow.pop %v550
      %v552 = vmul.f32 %v531, 1.442695
      %v553 = vpow.pop %v552
      %v554 = vmul.f32 %v532, 1.442695
      %v555 = vpow.pop %v554
      %v556 = vmul.f32 %v533, 1.442695
      %v557 = vpow.pop %v556
      %v558 = vmul.f32 %v534, 1.442695
      %v559 = vpow.pop %v558
      %v560 = vmul.f32 %v535, 1.442695
      %v561 = vpow.pop %v560
      %v562 = vmul.f32 %v536, 1.442695
      %v563 = vpow.pop %v562
      %v564 = vmul.f32 %v537, 1.442695
      %v565 = vpow.pop %v564
      %v566 = vmul.f32 %v538, 1.442695
      %v567 = vpow.pop %v566
      %v568 = vmul.f32 %v539, 1.442695
      %v569 = vpow.pop %v568
      %v570 = vmul.f32 %v540, 1.442695
      %v571 = vpow.pop %v570
      %v572 = vmul.f32 %v541, 1.442695
      %v573 = vpow.pop %v572
      %v574 = vadd.f32 %v543, 1.0
      %v575 = vadd.f32 %v545, 1.0
      %v576 = vadd.f32 %v547, 1.0
      %v577 = vadd.f32 %v549, 1.0
      %v578 = vadd.f32 %v551, 1.0
      %v579 = vadd.f32 %v553, 1.0
      %v580 = vadd.f32 %v555, 1.0
      %v581 = vadd.f32 %v557, 1.0
      %v582 = vadd.f32 %v559, 1.0
      %v583 = vadd.f32 %v561, 1.0
      %v584 = vadd.f32 %v563, 1.0
      %v585 = vadd.f32 %v565, 1.0
      %v586 = vadd.f32 %v567, 1.0
      %v587 = vadd.f32 %v569, 1.0
      %v588 = vadd.f32 %v571, 1.0
      %v589 = vadd.f32 %v573, 1.0
      %v590 = vrcp.pop %v574
      %v591 = vmul.f32 1.0, %v590
      %v592 = vrcp.pop %v575
      %v593 = vmul.f32 1.0, %v592
      %v594 = vrcp.pop %v576
      %v595 = vmul.f32 1.0, %v594
      %v596 = vrcp.pop %v577
      %v597 = vmul.f32 1.0, %v596
      %v598 = vrcp.pop %v578
      %v599 = vmul.f32 1.0, %v598
      %v600 = vrcp.pop %v579
      %v601 = vmul.f32 1.0, %v600
      %v602 = vrcp.pop %v580
      %v603 = vmul.f32 1.0, %v602
      %v604 = vrcp.pop %v581
      %v605 = vmul.f32 1.0, %v604
      %v606 = vrcp.pop %v582
      %v607 = vmul.f32 1.0, %v606
      %v608 = vrcp.pop %v583
      %v609 = vmul.f32 1.0, %v608
      %v610 = vrcp.pop %v584
      %v611 = vmul.f32 1.0, %v610
      %v612 = vrcp.pop %v585
      %v613 = vmul.f32 1.0, %v612
      %v614 = vrcp.pop %v586
      %v615 = vmul.f32 1.0, %v614
      %v616 = vrcp.pop %v587
      %v617 = vmul.f32 1.0, %v616
      %v618 = vrcp.pop %v588
      %v619 = vmul.f32 1.0, %v618
      %v620 = vrcp.pop %v589
      %v621 = vmul.f32 1.0, %v620
      %vm622 = vcmask 523264
      %623 = vst.msk [vmem:[%s264] sm:$0xff] %vm622, %v591
      %624 = vst.msk [vmem:[%s264 + $0x8] sm:$0xff] %vm622, %v593
      %625 = vst.msk [vmem:[%s264 + $0x10] sm:$0xff] %vm622, %v595
      %626 = vst.msk [vmem:[%s264 + $0x18] sm:$0xff] %vm622, %v597
      %627 = vst.msk [vmem:[%s264 + $0x20] sm:$0xff] %vm622, %v599
      %628 = vst.msk [vmem:[%s264 + $0x28] sm:$0xff] %vm622, %v601
      %629 = vst.msk [vmem:[%s264 + $0x30] sm:$0xff] %vm622, %v603
      %630 = vst.msk [vmem:[%s264 + $0x38] sm:$0xff] %vm622, %v605
      %631 = vst.msk [vmem:[%s264 + $0x40] sm:$0xff] %vm622, %v607
      %632 = vst.msk [vmem:[%s264 + $0x48] sm:$0xff] %vm622, %v609
      %633 = vst.msk [vmem:[%s264 + $0x50] sm:$0xff] %vm622, %v611
      %634 = vst.msk [vmem:[%s264 + $0x58] sm:$0xff] %vm622, %v613
      %635 = vst.msk [vmem:[%s264 + $0x60] sm:$0xff] %vm622, %v615
      %636 = vst.msk [vmem:[%s264 + $0x68] sm:$0xff] %vm622, %v617
      %637 = vst.msk [vmem:[%s264 + $0x70] sm:$0xff] %vm622, %v619
      %638 = vst.msk [vmem:[%s264 + $0x78] sm:$0xff] %vm622, %v621
      %s639 = smul.u32 16, %s19
      %p640 = scmp.lt.s32.totalorder %s639, 63
      %s641 = scalar_select %p640, %s639, 63
      %p642 = scmp.lt.s32.totalorder %s20, 0
      %s643 = scalar_select %p642, %s20, 0
      %s644 = sadd.s32 %s643, %s641
      %s645 = smul.addr %s644, 8
      %s646 = scalar_lea.vmem %s4, %s645
      // Predicated region
      $region37: #{tpu_custom_call.1} parent=35 // pred_check
        %p647 = pneg %p151
      $region38: #{tpu_custom_call.1} parent=35 // pred_check_branch
        %649 = sbr.rel (%p647) target = $region40
      $region39: #{tpu_custom_call.1} parent=35 // pred_region
        %s650 = smul.u32 16, %s19
      $region40: #{tpu_custom_call.1} parent=35 // pred_fallthru
        _
    $region36: #{tpu_custom_call.1} parent=5 // pred_fallthru
      _
    %p651 = scmp.le.s32.totalorder 2, %s10
    // Predicated region
    $region41: #{tpu_custom_call.1} parent=5 // pred_check
      %p652 = pneg %p651
    $region42: #{tpu_custom_call.1} parent=5 // pred_check_branch
      %654 = sbr.rel (%p652) target = $region44
    $region43: #{tpu_custom_call.1} parent=5 // pred_region
      %s655 = ssub.s32 %s10, 2
      // Predicated region
      $region45: #{tpu_custom_call.1} parent=43 // pred_check
        %p656 = pneg %p157
      $region46: #{tpu_custom_call.1} parent=43 // pred_check_branch
        %658 = sbr.rel (%p656) target = $region48
      $region47: #{tpu_custom_call.1} parent=43 // pred_region
        %s659 = smul.u32 16, %s21
        %p660 = scmp.lt.s32.totalorder %s659, 63
        %s661 = scalar_select %p660, %s659, 63
        %p662 = scmp.lt.s32.totalorder %s22, 0
        %s663 = scalar_select %p662, %s22, 0
        %s664 = sadd.s32 %s663, %s661
        %s665 = smul.addr %s664, 8
        %s666 = scalar_lea.vmem %s4, %s665
      $region48: #{tpu_custom_call.1} parent=43 // pred_fallthru
        _
    $region44: #{tpu_custom_call.1} parent=5 // pred_fallthru
      _
  $region6: #{tpu_custom_call.1} parent=0 // loop_footer
    %s14 = sadd.s32 1, %s10
  $region7: #{tpu_custom_call.1} parent=0 // loop_footer_branch
    %9 = sbr.rel target = $region3
  $region8: #{tpu_custom_call.1} parent=0 // loop_exit
    _

</llo_original>
